<compile_context>
chip_gen: v6e
topology: v6e:2x2x1
jax: 0.10.0
libtpu: 0.0.40
codegen_flags: <defaults>
</compile_context>

<pallas_src>
import functools

import jax
import jax.numpy as jnp
from jax.experimental import pallas as pl
from jax.experimental.pallas import tpu as pltpu


# --------------------------------------------------------------------------- #
# Kernel
# --------------------------------------------------------------------------- #
def _pool_linear_kernel(x_ref, wt_ref, b_ref, o_ref, acc_ref, *,
                        inv_hw, c_tile, weight_resident):
    """One (batch-tile, channel-tile) grid step of global-avg-pool + Linear.

    x_ref  : (b_tile, c_tile, HW)                      activation (native dtype)
    wt_ref : (C_pad, K_pad) if weight_resident else (c_tile, K_pad)
    b_ref  : (1, K_pad)      f32
    o_ref  : (b_tile, K_pad) out dtype
    acc_ref: (b_tile, K_pad) f32; persists across the channel (reduction) axis
    """
    c_step = pl.program_id(1)

    @pl.when(c_step == 0)
    def _():
        acc_ref[...] = jnp.zeros_like(acc_ref)

    # Lane-axis reduce with f32 accumulation; no full-tile f32 copy.
    pooled = jnp.sum(x_ref[...], axis=-1, dtype=jnp.float32)      # (b_tile, c_tile)

    if weight_resident:
        start = pl.multiple_of(c_step * c_tile, c_tile)
        wt = wt_ref[pl.ds(start, c_tile), :]                       # (c_tile, K_pad)
    else:
        wt = wt_ref[...]

    # Native-dtype MXU inputs, f32 accumulation.
    acc_ref[...] += jnp.dot(pooled.astype(wt.dtype), wt,
                            preferred_element_type=jnp.float32)

    @pl.when(c_step == pl.num_programs(1) - 1)
    def _():
        # Normalize by the TRUE H*W of the full array, then add bias.
        o_ref[...] = (acc_ref[...] * inv_hw + b_ref[...]).astype(o_ref.dtype)


# --------------------------------------------------------------------------- #
# Tiling helpers
# --------------------------------------------------------------------------- #
def _round_up(x, m):
    return ((x + m - 1) // m) * m


def _largest_tile(dim, multiple, cap):
    """Largest multiple-of-`multiple` divisor of `dim` that is <= cap.

    Assumes `multiple` divides `dim`; floors at `multiple`.
    """
    if dim <= cap:
        return dim
    best = multiple
    d = multiple
    while d <= cap:
        if dim % d == 0:
            best = d
        d += multiple
    return best


def _pick_batch_tile(B):
    """Multiple-of-8 divisor of B, up to 256; keeps >=2 tiles when B >= 16.

    Falls back to the full batch (always a legal full-extent block)."""
    cap = min(B, 256)
    if B >= 16:
        cap = min(cap, max(8, B // 2))     # leave work for v7x's second TC
    best = None
    d = 8
    while d <= cap:
        if B % d == 0:
            best = d
        d += 8
    return best if best is not None else B


def _vmem_plan():
    """(vmem_limit_bytes, per-buffer x-tile target) tuned per TPU generation."""
    try:
        cap = int(pltpu.get_tpu_info().vmem_capacity_bytes)
    except Exception:
        cap = None
    if cap is not None and cap >= (100 << 20):
        # v5e / v6e: 128 MiB physical VMEM -> bigger tiles, higher scoped limit.
        return 80 << 20, 12 << 20
    # v7x (64 MiB VMEM) or unknown chip: stay well under the physical limit.
    return 48 << 20, 7 << 20


# --------------------------------------------------------------------------- #
# Wrapper
# --------------------------------------------------------------------------- #
def classifier_forward(x_nchw, weight, bias, shape=None):
    """Default-task Classifier forward (global avg pool + Linear).

    x_nchw: (B, C, H, W)      NCHW, any float dtype (bf16 kept bf16 on HBM path)
    weight: (num_classes, C)  nn.Linear weight layout
    bias:   (num_classes,)
    shape:  unused in the default branch.
    """
    del shape
    B, C, H, W = x_nchw.shape
    K = weight.shape[0]
    HW = H * W

    x_dtype = x_nchw.dtype
    x_itemsize = jnp.dtype(x_dtype).itemsize
    w_itemsize = jnp.dtype(weight.dtype).itemsize
    out_dtype = jnp.promote_types(x_dtype, weight.dtype)
    out_itemsize = jnp.dtype(out_dtype).itemsize

    # ----- wrapper-side layout plumbing (one-time, cheap) ---------------------
    x_flat = x_nchw.reshape(B, C, HW)

    # Pad channels to a sublane multiple so every channel tile is (8,128)-legal.
    C_pad = _round_up(C, 8)
    if C_pad != C:
        x_flat = jnp.pad(x_flat, ((0, 0), (0, C_pad - C), (0, 0)))

    # Pre-transpose weight -> (C_pad, K_pad); pad K to a lane multiple so the
    # accumulator / output stores are lane-dense and the MXU N dim is full.
    K_pad = _round_up(K, 128)
    weight_t = jnp.transpose(weight)                              # (C, K)
    if (C_pad != C) or (K_pad != K):
        weight_t = jnp.pad(weight_t, ((0, C_pad - C), (0, K_pad - K)))
    bias_p = bias.astype(jnp.float32)
    if K_pad != K:
        bias_p = jnp.pad(bias_p, (0, K_pad - K))
    bias2d = bias_p.reshape(1, K_pad)

    # ----- tile selection / VMEM budgeting ------------------------------------
    vmem_limit, x_tile_target = _vmem_plan()
    budget = int(vmem_limit * 0.85)

    b_tile = _pick_batch_tile(B)
    num_b_tiles = B // b_tile

    HW_lanes = _round_up(HW, 128)            # real lane footprint of the x tile

    # Weight fully VMEM-resident (read from HBM exactly once) when it fits.
    weight_resident = (2 * C_pad * K_pad * w_itemsize) <= (16 << 20)

    per_c_bytes = b_tile * HW_lanes * x_itemsize       # one channel, one buffer
    c_cap = max(8, x_tile_target // per_c_bytes)
    c_tile = _largest_tile(C_pad, 8, min(c_cap, C_pad))

    def _vmem_total(ct, resident):
        x_b = 2 * b_tile * ct * HW_lanes * x_itemsize           # double-buffered
        w_rows = C_pad if resident else ct
        w_b = 2 * w_rows * K_pad * w_itemsize
        o_b = 2 * _round_up(b_tile, 8) * K_pad * out_itemsize
        acc_b = _round_up(b_tile, 8) * K_pad * 4
        bias_b = 2 * 8 * K_pad * 4
        return x_b + w_b + o_b + acc_b + bias_b

    # Shrink channel tile, then drop weight residency, until the budget fits.
    while _vmem_total(c_tile, weight_resident) > budget and c_tile > 8:
        c_tile = _largest_tile(C_pad, 8, c_tile - 8)
    if _vmem_total(c_tile, weight_resident) > budget and weight_resident:
        weight_resident = False

    num_c_tiles = C_pad // c_tile

    # ----- honest cost estimate ------------------------------------------------
    w_reads = 1 if weight_resident else num_b_tiles
    cost = pl.CostEstimate(
        flops=B * C * HW + 2 * B * C * K,
        transcendentals=0,
        bytes_accessed=(B * C_pad * HW * x_itemsize
                        + w_reads * C_pad * K_pad * w_itemsize
                        + B * K_pad * out_itemsize
                        + K_pad * 4),
    )

    kernel = functools.partial(
        _pool_linear_kernel,
        inv_hw=float(1.0 / HW),
        c_tile=c_tile,
        weight_resident=weight_resident,
    )

    if weight_resident:
        w_spec = pl.BlockSpec((C_pad, K_pad), lambda i, j: (0, 0))   # resident
    else:
        w_spec = pl.BlockSpec((c_tile, K_pad), lambda i, j: (j, 0))  # streamed

    out_padded = pl.pallas_call(
        kernel,
        out_shape=jax.ShapeDtypeStruct((B, K_pad), out_dtype),
        grid_spec=pltpu.PrefetchScalarGridSpec(
            num_scalar_prefetch=0,
            grid=(num_b_tiles, num_c_tiles),
            in_specs=[
                pl.BlockSpec((b_tile, c_tile, HW), lambda i, j: (i, j, 0)),
                w_spec,
                pl.BlockSpec((1, K_pad), lambda i, j: (0, 0)),
            ],
            out_specs=pl.BlockSpec((b_tile, K_pad), lambda i, j: (i, 0)),
            scratch_shapes=[pltpu.VMEM((b_tile, K_pad), jnp.float32)],
        ),
        compiler_params=pltpu.CompilerParams(
            dimension_semantics=("parallel", "arbitrary"),
            vmem_limit_bytes=int(vmem_limit),
        ),
        cost_estimate=cost,
    )(x_flat, weight_t, bias2d)

    return out_padded[:, :K] if K_pad != K else out_padded


def _reference_forward(x_nchw, weight, bias):
    pooled = jnp.mean(x_nchw.astype(jnp.float32), axis=(2, 3))       # (B, C)
    return pooled @ weight.astype(jnp.float32).T + bias[None, :]


if __name__ == "__main__":
    # Small shapes: batch=2, channels=4, spatial=16x16, num_classes=10.
    B, C, H, W = 2, 4, 16, 16
    num_classes = 10

    key = jax.random.PRNGKey(0)
    kx, kw, kb = jax.random.split(key, 3)

    x = jax.random.normal(kx, (B, C, H, W), dtype=jnp.float32)
    # Deterministic parameter init (shapes from nn.Linear(channels, num_classes)).
    bound = 1.0 / float(C) ** 0.5
    weight = jax.random.uniform(kw, (num_classes, C), jnp.float32, -bound, bound)
    bias = jax.random.uniform(kb, (num_classes,), jnp.float32, -bound, bound)

    out = classifier_forward(x, weight, bias, shape=(H, W))
    out = jax.block_until_ready(out)

    ref = _reference_forward(x, weight, bias)
    assert out.shape == (B, num_classes)
    assert jnp.allclose(out, ref, atol=1e-5, rtol=1e-5), "mismatch vs. reference"

    print("KERNEL_OK")
</pallas_src>

<mosaic_0001>
module attributes {stable_mosaic.version = 11 : i64} {
  func.func @_pool_linear_kernel(%arg0: i32, %arg1: i32, %arg2: memref<2x8x256xf32, #tpu.memory_space<vmem>>, %arg3: memref<8x128xf32, #tpu.memory_space<vmem>>, %arg4: memref<1x128xf32, #tpu.memory_space<vmem>>, %arg5: memref<2x128xf32, #tpu.memory_space<vmem>>, %arg6: memref<2x128xf32, #tpu.memory_space<vmem>>) attributes {dimension_semantics = [#tpu.dimension_semantics<parallel>, #tpu.dimension_semantics<arbitrary>], iteration_bounds = array<i64: 1, 1>, scalar_prefetch = 0 : i64, scratch_operands = 1 : i64, tpu.core_type = #tpu.core_type<tc>, window_params = [{transform_indices = @transform_0, window_bounds = array<i64: 2, 8, 256>}, {pipeline_mode = #tpu.pipeline_mode<synchronous>, transform_indices = @transform_1, window_bounds = array<i64: 8, 128>}, {pipeline_mode = #tpu.pipeline_mode<synchronous>, transform_indices = @transform_2, window_bounds = array<i64: 1, 128>}, {transform_indices = @transform_3, window_bounds = array<i64: 2, 128>}]} {
    %c0_i32 = arith.constant 0 : i32
    %0 = arith.cmpi eq, %arg1, %c0_i32 : i32
    %1 = arith.extui %0 : i1 to i32
    %c0_i32_0 = arith.constant 0 : i32
    %2 = arith.cmpi ne, %1, %c0_i32_0 : i32
    scf.if %2 {
      %cst_11 = arith.constant 0.000000e+00 : f32
      %16 = vector.broadcast %cst_11 : f32 to vector<2x128xf32>
      %c0_12 = arith.constant 0 : index
      %c0_13 = arith.constant 0 : index
      %17 = vector.load %arg6[%c0_12, %c0_13] : memref<2x128xf32, #tpu.memory_space<vmem>>, vector<2x128xf32>
      tpu.vector_store %arg6[%c0_12, %c0_13], %16 {strides = array<i32>} : memref<2x128xf32, #tpu.memory_space<vmem>>, vector<2x128xf32>,
    } else {
    }
    %c0 = arith.constant 0 : index
    %c0_1 = arith.constant 0 : index
    %c0_2 = arith.constant 0 : index
    %3 = vector.load %arg2[%c0, %c0_1, %c0_2] : memref<2x8x256xf32, #tpu.memory_space<vmem>>, vector<2x8x256xf32>
    %cst = arith.constant dense<0.000000e+00> : vector<2x8xf32>
    %4 = vector.multi_reduction <add>, %3, %cst [2] : vector<2x8x256xf32> to vector<2x8xf32>
    %c8_i32 = arith.constant 8 : i32
    %5 = arith.muli %arg1, %c8_i32 : i32
    %6 = tpu.assume_multiple %5, 8 : i32
    %7 = arith.index_cast %6 : i32 to index
    %c0_3 = arith.constant 0 : index
    %8 = vector.load %arg3[%7, %c0_3] : memref<8x128xf32, #tpu.memory_space<vmem>>, vector<8x128xf32>
    %c0_4 = arith.constant 0 : index
    %c0_5 = arith.constant 0 : index
    %9 = vector.load %arg6[%c0_4, %c0_5] : memref<2x128xf32, #tpu.memory_space<vmem>>, vector<2x128xf32>
    %cst_6 = arith.constant dense<0.000000e+00> : vector<2x128xf32>
    %10 = tpu.matmul %4, %8, %cst_6 {dimension_numbers = #tpu.dot_dimension_numbers<[1], [0], [0], [1], [0, 0, 1, 1], [], []>} : vector<2x8xf32>, vector<8x128xf32>, vector<2x128xf32> -> vector<2x128xf32>
    %11 = arith.addf %9, %10 : vector<2x128xf32>
    %c0_7 = arith.constant 0 : index
    %c0_8 = arith.constant 0 : index
    %12 = vector.load %arg6[%c0_7, %c0_8] : memref<2x128xf32, #tpu.memory_space<vmem>>, vector<2x128xf32>
    tpu.vector_store %arg6[%c0_7, %c0_8], %11 {strides = array<i32>} : memref<2x128xf32, #tpu.memory_space<vmem>>, vector<2x128xf32>,
    %c0_i32_9 = arith.constant 0 : i32
    %13 = arith.cmpi eq, %arg1, %c0_i32_9 : i32
    %14 = arith.extui %13 : i1 to i32
    %c0_i32_10 = arith.constant 0 : i32
    %15 = arith.cmpi ne, %14, %c0_i32_10 : i32
    scf.if %15 {
      %c0_11 = arith.constant 0 : index
      %c0_12 = arith.constant 0 : index
      %16 = vector.load %arg6[%c0_11, %c0_12] : memref<2x128xf32, #tpu.memory_space<vmem>>, vector<2x128xf32>
      %cst_13 = arith.constant 3.906250e-03 : f32
      %17 = vector.broadcast %cst_13 : f32 to vector<2x128xf32>
      %18 = arith.mulf %16, %17 : vector<2x128xf32>
      %c0_14 = arith.constant 0 : index
      %c0_15 = arith.constant 0 : index
      %19 = vector.load %arg4[%c0_14, %c0_15] : memref<1x128xf32, #tpu.memory_space<vmem>>, vector<1x128xf32>
      %20 = vector.broadcast %19 : vector<1x128xf32> to vector<2x128xf32>
      %21 = arith.addf %18, %20 : vector<2x128xf32>
      %c0_16 = arith.constant 0 : index
      %c0_17 = arith.constant 0 : index
      %22 = vector.load %arg5[%c0_16, %c0_17] : memref<2x128xf32, #tpu.memory_space<vmem>>, vector<2x128xf32>
      tpu.vector_store %arg5[%c0_16, %c0_17], %21 {strides = array<i32>} : memref<2x128xf32, #tpu.memory_space<vmem>>, vector<2x128xf32>,
    } else {
    }
    return
  }
  func.func @transform_0(%arg0: i32, %arg1: i32) -> (i32, i32, i32) {
    %c0_i32 = arith.constant 0 : i32
    %c0_i32_0 = arith.constant 0 : i32
    return %arg0, %arg1, %c0_i32 : i32, i32, i32
  }
  func.func @transform_1(%arg0: i32, %arg1: i32) -> (i32, i32) {
    %c0_i32 = arith.constant 0 : i32
    %c0_i32_0 = arith.constant 0 : i32
    %c0_i32_1 = arith.constant 0 : i32
    return %c0_i32, %c0_i32_0 : i32, i32
  }
  func.func @transform_2(%arg0: i32, %arg1: i32) -> (i32, i32) {
    %c0_i32 = arith.constant 0 : i32
    %c0_i32_0 = arith.constant 0 : i32
    %c0_i32_1 = arith.constant 0 : i32
    return %c0_i32, %c0_i32_0 : i32, i32
  }
  func.func @transform_3(%arg0: i32, %arg1: i32) -> (i32, i32) {
    %c0_i32 = arith.constant 0 : i32
    %c0_i32_0 = arith.constant 0 : i32
    return %arg0, %c0_i32 : i32, i32
  }
}

</mosaic_0001>

<llo_original>
// kernel: tpu_custom_call.1
$region0: #{tpu_custom_call.1}
  #allocation0 [shape = 'u32[]', space=smem, size = 0x4, offset = 0x4, fixed_abs, tag = 'smem constant byte address 0x4 - core index']
  #allocation1 [shape = 'u32[144,128]{1,0:T(1,128)}', space=vmem, size = 0x12000, scoped, tag = 'internal scratch']
  #allocation2 [shape = 'f32[2,128]{1,0:T(2,128)}', space=vmem, size = 0x400, scoped, tag = 'scratch operand']
  %s0 = inlined_call_operand.hbm [shape: f32[2,8,256], index: 0, kind: input, shape index: {}]
  %s1 = inlined_call_operand.hbm [shape: f32[8,128], index: 1, kind: input, shape index: {}]
  %s2 = inlined_call_operand.vmem [shape: f32[1,128], index: 2, kind: input, shape index: {}]
  %s3 = inlined_call_operand.hbm [shape: f32[2,128], index: 3, kind: output, shape index: {}]
  %s4 = sld [smem:[#allocation0]]
  $region38: #{tpu_custom_call.1} parent=0
    _
  %s6 = ssub.s32 1, %s4
  %s7 = scalar_select 0, %s6, %s4
  $region1: #{tpu_custom_call.1} parent=0
    #allocation3 [shape = 'u8[16384]{0}', space=vmem, size = 0x4000, scoped, tag = 'input window, operand 0, single buffered']
    #allocation4 [shape = 's32[1]{0}', space=sflag, size = 0x4, scoped, tag = 'scoped memory for tpu_custom_call.1']
    #allocation5 [shape = 's32[1]{0}', space=sflag, size = 0x4, scoped, tag = 'scoped memory for tpu_custom_call.1']
    #allocation6 [shape = 'u8[4096]{0}', space=vmem, size = 0x1000, scoped, tag = 'input window, operand 1, single buffered']
    #allocation7 [shape = 's32[1]{0}', space=sflag, size = 0x4, scoped, tag = 'scoped memory for tpu_custom_call.1']
    #allocation8 [shape = 'u8[1024]{0}', space=vmem, size = 0x400, scoped, tag = 'output window, operand 0, single buffered']
    %8 = vsyncpa [#allocation4], 0
    %9 = vsyncpa [#allocation7], 0
    %10 = vsyncpa [#allocation5], 0
    // Predicated region
    $region2: #{tpu_custom_call.1} parent=1 // pred_check
      _
    $region3: #{tpu_custom_call.1} parent=1 // pred_check_branch
      %12 = sbr.rel (0) target = $region5
    $region4: #{tpu_custom_call.1} parent=1 // pred_region
      %s14 = ssub.s32 512, 512
      %15 = vsyncadd [#allocation4], %s14
      %s16 = sshll.u32 [#allocation3], 4
      %s17 = int_to_ptr.vmem [resolvable:$true] %s16
      %22 = dma.hbm_to_vmem [thread:$0]  %s0, 512, %s17, [#allocation4], 256, 256, 16
    $region5: #{tpu_custom_call.1} parent=1 // pred_fallthru
      _
    // Predicated region
    $region6: #{tpu_custom_call.1} parent=1 // pred_check
      _
    $region7: #{tpu_custom_call.1} parent=1 // pred_check_branch
      %24 = sbr.rel (0) target = $region9
    $region8: #{tpu_custom_call.1} parent=1 // pred_region
      %s26 = ssub.s32 128, 128
      %27 = vsyncadd [#allocation7], %s26
      %s29 = sshll.u32 [#allocation6], 4
      %s30 = int_to_ptr.vmem [resolvable:$true] %s29
      %32 = dma.hbm_to_vmem [thread:$0]  %s1, 128, %s30, [#allocation7]
    $region9: #{tpu_custom_call.1} parent=1 // pred_fallthru
      _
    // Predicated region
    $region10: #{tpu_custom_call.1} parent=1 // pred_check
      _
    $region11: #{tpu_custom_call.1} parent=1 // pred_check_branch
      %34 = sbr.rel (0) target = $region13
    $region12: #{tpu_custom_call.1} parent=1 // pred_region
      _
    $region13: #{tpu_custom_call.1} parent=1 // pred_fallthru
      _
    // Predicated region
    $region14: #{tpu_custom_call.1} parent=1 // pred_check
      _
    $region15: #{tpu_custom_call.1} parent=1 // pred_check_branch
      %36 = sbr.rel (0) target = $region17
    $region16: #{tpu_custom_call.1} parent=1 // pred_region
      %37 = dma.done [#allocation4], 512
    $region17: #{tpu_custom_call.1} parent=1 // pred_fallthru
      _
    // Predicated region
    $region18: #{tpu_custom_call.1} parent=1 // pred_check
      _
    $region19: #{tpu_custom_call.1} parent=1 // pred_check_branch
      %39 = sbr.rel (0) target = $region21
    $region20: #{tpu_custom_call.1} parent=1 // pred_region
      %40 = dma.done [#allocation7], 128
    $region21: #{tpu_custom_call.1} parent=1 // pred_fallthru
      _
    %p41 = scmp.eq.s32.totalorder 0, 0
    // Predicated region
    $region22: #{tpu_custom_call.1} parent=1 // pred_check
      %p42 = pneg %p41
    $region23: #{tpu_custom_call.1} parent=1 // pred_check_branch
      %44 = sbr.rel (%p42) target = $region25
    $region24: #{tpu_custom_call.1} parent=1 // pred_region
      %45 = vst [vmem:[#allocation2] sm:$0x3] 0.0
    $region25: #{tpu_custom_call.1} parent=1 // pred_fallthru
      _
    %v46 = vld [vmem:[#allocation3] sm:$0xff]
    %v47 = vld [vmem:[#allocation3 + $0x8] sm:$0xff]
    %v48 = vld [vmem:[#allocation3 + $0x10] sm:$0xff]
    %v49 = vld [vmem:[#allocation3 + $0x18] sm:$0xff]
    %v50 = vadd.f32 %v46, %v47
    %51 = vadd.xlane.f32.xlu0 %v50
    %v52 = vpop.xlane.xlu0 %51
    %v53 = vadd.f32 %v48, %v49
    %54 = vadd.xlane.f32.xlu0 %v53
    %v55 = vpop.xlane.xlu0 %54
    %s56 = smul.u32 0, 8
    %s57 = scalar_lea.vmem [#allocation6], %s56
    %v58 = vld [vmem:[%s57] sm:$0xff]
    %v59 = vld [vmem:[#allocation2] sm:$0x3]
    %v62 = vlaneseq
    %v63 = vand.u32 %v62, 127
    %v64 = vlaneseq
    %v65 = vshrl.u32 %v64, 7
    %v66 = vsub.s32 %v63, %v65
    %v67 = vrot.slane %v52, %v66
    %v68 = vlaneseq
    %v69 = vshrl.u32 %v68, 7
    %v70 = vsub.s32 %v63, %v69
    %v71 = vrot.slane %v55, %v70
    %vm72 = vcmask 1041409
    %v73 = vsel %vm72, %v71, %v67
    %vm74 = vcmask 64512
    %v75 = vsel %vm74, %v73, 0
    %77 = vmatprep.subr.mxu0 0.0
    %78 = vmatpush1.msra.mxu0 0.0
    %79 = vmatprep.subr.mxu0 0.0
    %80 = vmatpush1.msra.mxu0 0.0
    %81 = vmatprep.subr.mxu0 0.0
    %82 = vmatpush1.msra.mxu0 0.0
    %83 = vmatprep.subr.mxu0 0.0
    %84 = vmatpush1.msra.mxu0 0.0
    %85 = vmatprep.subr.mxu0 0.0
    %86 = vmatpush1.msra.mxu0 0.0
    %87 = vmatprep.subr.mxu0 0.0
    %88 = vmatpush1.msra.mxu0 0.0
    %89 = vmatprep.subr.mxu0 0.0
    %90 = vmatpush1.msra.mxu0 0.0
    %91 = vmatprep.subr.mxu0 0.0
    %92 = vmatpush1.msra.mxu0 0.0
    %93 = vmatprep.subr.mxu0 0.0
    %94 = vmatpush1.msra.mxu0 0.0
    %95 = vmatprep.subr.mxu0 0.0
    %96 = vmatpush1.msra.mxu0 0.0
    %97 = vmatprep.subr.mxu0 0.0
    %98 = vmatpush1.msra.mxu0 0.0
    %99 = vmatprep.subr.mxu0 0.0
    %100 = vmatpush1.msra.mxu0 0.0
    %101 = vmatprep.subr.mxu0 0.0
    %102 = vmatpush1.msra.mxu0 0.0
    %103 = vmatprep.subr.mxu0 0.0
    %104 = vmatpush1.msra.mxu0 0.0
    %105 = vmatprep.subr.mxu0 0.0
    %106 = vmatpush1.msra.mxu0 0.0
    %107 = vmatprep.subr.mxu0 0.0
    %108 = vmatpush1.msra.mxu0 %v58
    %109 = vmatprep.subr.mxu0 0.0
    %110 = vmatpush2.msra.mxu0 0.0
    %111 = vmatprep.subr.mxu0 0.0
    %112 = vmatpush2.msra.mxu0 0.0
    %113 = vmatprep.subr.mxu0 0.0
    %114 = vmatpush2.msra.mxu0 0.0
    %115 = vmatprep.subr.mxu0 0.0
    %116 = vmatpush2.msra.mxu0 0.0
    %117 = vmatprep.subr.mxu0 0.0
    %118 = vmatpush2.msra.mxu0 0.0
    %119 = vmatprep.subr.mxu0 0.0
    %120 = vmatpush2.msra.mxu0 0.0
    %121 = vmatprep.subr.mxu0 0.0
    %122 = vmatpush2.msra.mxu0 0.0
    %123 = vmatprep.subr.mxu0 0.0
    %124 = vmatpush2.msra.mxu0 0.0
    %125 = vmatprep.subr.mxu0 0.0
    %126 = vmatpush2.msra.mxu0 0.0
    %127 = vmatprep.subr.mxu0 0.0
    %128 = vmatpush2.msra.mxu0 0.0
    %129 = vmatprep.subr.mxu0 0.0
    %130 = vmatpush2.msra.mxu0 0.0
    %131 = vmatprep.subr.mxu0 0.0
    %132 = vmatpush2.msra.mxu0 0.0
    %133 = vmatprep.subr.mxu0 0.0
    %134 = vmatpush2.msra.mxu0 0.0
    %135 = vmatprep.subr.mxu0 0.0
    %136 = vmatpush2.msra.mxu0 0.0
    %137 = vmatprep.subr.mxu0 0.0
    %138 = vmatpush2.msra.mxu0 0.0
    %139 = vmatprep.subr.mxu0 0.0
    %140 = vmatpush2.msra.mxu0 0.0
    %141 = vmatprep.mubr.f32.mxu0 0.0
    %142 = vmatmul.mubr.f32.gmra.mxu0 %v75
    %v143 = vpop.f32.mrf.mxu0
    %v144 = vadd.f32 0.0, %v143
    %v145 = vpop.f32.mrf.mxu0
    %146 = vdwg.mxu0
    %v147 = vadd.f32 %v59, %v144
    %148 = vst [vmem:[#allocation2] sm:$0x3] %v147
    // Predicated region
    $region26: #{tpu_custom_call.1} parent=1 // pred_check
      %p149 = pneg %p41
    $region27: #{tpu_custom_call.1} parent=1 // pred_check_branch
      %151 = sbr.rel (%p149) target = $region29
    $region28: #{tpu_custom_call.1} parent=1 // pred_region
      %v152 = vld [vmem:[#allocation2] sm:$0x3]
      %v153 = vmul.f32 %v152, 0.00390625
      %v154 = vld [vmem:[%s2] sm:$0x1]
      %v156 = vlaneseq
      %v157 = vshrl.u32 %v156, 7
      %v158 = vsub.s32 0, %v157
      %v159 = vrot.slane %v154, %v158
      %v161 = vadd.f32 %v153, %v159
      %162 = vst [vmem:[#allocation8] sm:$0x3] %v161
    $region29: #{tpu_custom_call.1} parent=1 // pred_fallthru
      _
    // Predicated region
    $region30: #{tpu_custom_call.1} parent=1 // pred_check
      _
    $region31: #{tpu_custom_call.1} parent=1 // pred_check_branch
      %164 = sbr.rel (0) target = $region33
    $region32: #{tpu_custom_call.1} parent=1 // pred_region
      %s166 = ssub.s32 32, 32
      %167 = vsyncadd [#allocation5], %s166
      %s169 = sshll.u32 [#allocation8], 4
      %s170 = int_to_ptr.vmem [resolvable:$true] %s169
      %172 = dma.vmem_to_hbm [thread:$0]  %s170, 32, %s3, [#allocation5]
    $region33: #{tpu_custom_call.1} parent=1 // pred_fallthru
      _
    // Predicated region
    $region34: #{tpu_custom_call.1} parent=1 // pred_check
      _
    $region35: #{tpu_custom_call.1} parent=1 // pred_check_branch
      %174 = sbr.rel (0) target = $region37
    $region36: #{tpu_custom_call.1} parent=1 // pred_region
      %175 = dma.done [#allocation5], 32
    $region37: #{tpu_custom_call.1} parent=1 // pred_fallthru
      _
    %176 = vsyncpa [#allocation4], 1
    %177 = vsyncpa [#allocation7], 1
    %178 = vsyncpa [#allocation5], 1

</llo_original>
